<compile_context>
chip_gen: v7x
topology: tpu7x:2x2x1
jax: 0.10.0
libtpu: 0.0.40
codegen_flags: <defaults>
</compile_context>

<pallas_src>
import math

import jax
import jax.numpy as jnp
from jax.experimental import pallas as pl
from jax.experimental.pallas import tpu as pltpu

# ---------------- model dimensions ----------------
ENC_IN = 64          # encoder_layer_sizes[0]
ENC_HID = 32         # encoder_layer_sizes[1]
LATENT = 16          # latent_size
DEC_HID = 32         # decoder_layer_sizes[0]
DEC_OUT = 64         # decoder_layer_sizes[1]

# ---------------- packed parameter slab layout ([P_ROWS, 128] f32) ----------------
# Weights are stored as (in, out) so the kernel computes x @ W + b.
EW0_R0 = 0                        # rows   0: 64  encoder L0 weight (64,32)
WH_R0 = EW0_R0 + ENC_IN           # rows  64: 96  fused [wm | wv] head weight (32,32)
DW0_R0 = WH_R0 + ENC_HID          # rows  96:112  decoder L0 weight (16,32)
DW1_R0 = DW0_R0 + LATENT          # rows 112:144  decoder L1 weight (32,64)
B_R0 = DW1_R0 + DEC_HID           # rows 144:148  bias rows: eb0, [bm|bv], db0, db1
P_ROWS = ((B_R0 + 4 + 7) // 8) * 8   # pad rows to a multiple of 8 -> 152
P_LANES = 128


# ---------------- Pallas kernel ----------------
def vae_fwd_kernel(x_ref, eps_ref, p_ref, recon_ref, mu_ref, lv_ref, z_ref):
    # streaming activations arrive bf16; widen to f32 right after load
    # (keeps the v5e VPU path f32; dots accumulate f32 regardless).
    x = x_ref[...].astype(jnp.float32)                     # (tb, 64)
    eps = eps_ref[...].astype(jnp.float32)                 # (tb, 16)

    # static slices of the grid-resident f32 parameter slab (no extra DMA)
    ew0 = p_ref[EW0_R0:EW0_R0 + ENC_IN, 0:ENC_HID]         # (64, 32)
    wh = p_ref[WH_R0:WH_R0 + ENC_HID, 0:2 * LATENT]        # (32, 32) = [wm | wv]
    dw0 = p_ref[DW0_R0:DW0_R0 + LATENT, 0:DEC_HID]         # (16, 32)
    dw1 = p_ref[DW1_R0:DW1_R0 + DEC_HID, 0:DEC_OUT]        # (32, 64)
    eb0 = p_ref[B_R0 + 0:B_R0 + 1, 0:ENC_HID]              # (1, 32)
    bh = p_ref[B_R0 + 1:B_R0 + 2, 0:2 * LATENT]            # (1, 32) = [bm | bv]
    db0 = p_ref[B_R0 + 2:B_R0 + 3, 0:DEC_HID]              # (1, 32)
    db1 = p_ref[B_R0 + 3:B_R0 + 4, 0:DEC_OUT]              # (1, 64)

    # ---- Encoder MLP: Linear + ReLU ----
    h = jnp.maximum(
        jnp.dot(x, ew0, preferred_element_type=jnp.float32) + eb0, 0.0)

    # ---- fused means / log_var heads: one matmul, split by static slices ----
    head = jnp.dot(h, wh, preferred_element_type=jnp.float32) + bh
    mu = head[:, 0:LATENT]
    lv = head[:, LATENT:2 * LATENT]

    # ---- reparameterize: z = mu + eps * exp(0.5 * log_var) ----
    z = mu + eps * jnp.exp(0.5 * lv)

    # ---- Decoder MLP: Linear + ReLU, Linear + Sigmoid ----
    d = jnp.maximum(
        jnp.dot(z, dw0, preferred_element_type=jnp.float32) + db0, 0.0)
    logits = jnp.dot(d, dw1, preferred_element_type=jnp.float32) + db1
    # exact sigmoid via a single EUP tanh (no approx-reciprocal, no inf edge case)
    recon = 0.5 * jnp.tanh(0.5 * logits) + 0.5

    # ---- one full-block store per output ----
    recon_ref[...] = recon.astype(recon_ref.dtype)
    mu_ref[...] = mu
    lv_ref[...] = lv
    z_ref[...] = z


# ---------------- wrapper ----------------
def _pick_tb(batch):
    """Largest batch tile that still leaves >=2 grid steps (keeps both v7x
    TensorCores busy on the 'parallel' batch axis); falls back to the whole
    batch for tiny inputs."""
    for tb in (2048, 1024, 512, 256, 128, 64, 32, 16, 8):
        if tb <= batch // 2 and batch % tb == 0:
            return tb
    return batch


def vae_forward(x, eps, param_slab, *, tb=None):
    """Fused VAE forward.

    x: (B, ENC_IN), eps: (B, LATENT)  -- streamed at bf16 through HBM.
    param_slab: (P_ROWS, 128) f32 packed weights (grid-resident, single DMA).
    Returns (recon bf16, mu f32, log_var f32, z f32).
    """
    B = x.shape[0]
    if tb is None:
        tb = _pick_tb(B)
    assert B % tb == 0 and tb % 8 == 0, "batch tile must divide B and be 8-aligned"

    x = x.astype(jnp.bfloat16)
    eps = eps.astype(jnp.bfloat16)

    out_shapes = (
        jax.ShapeDtypeStruct((B, DEC_OUT), jnp.bfloat16),   # recon_x
        jax.ShapeDtypeStruct((B, LATENT), jnp.float32),     # means
        jax.ShapeDtypeStruct((B, LATENT), jnp.float32),     # log_var
        jax.ShapeDtypeStruct((B, LATENT), jnp.float32),     # z
    )

    recon, mu, lv, z = pl.pallas_call(
        vae_fwd_kernel,
        out_shape=out_shapes,
        grid_spec=pltpu.PrefetchScalarGridSpec(
            num_scalar_prefetch=0,
            grid=(B // tb,),
            in_specs=[
                pl.BlockSpec((tb, ENC_IN), lambda i: (i, 0)),        # x (bf16)
                pl.BlockSpec((tb, LATENT), lambda i: (i, 0)),        # eps (bf16)
                pl.BlockSpec((P_ROWS, P_LANES), lambda i: (0, 0)),   # resident weights
            ],
            out_specs=(
                pl.BlockSpec((tb, DEC_OUT), lambda i: (i, 0)),
                pl.BlockSpec((tb, LATENT), lambda i: (i, 0)),
                pl.BlockSpec((tb, LATENT), lambda i: (i, 0)),
                pl.BlockSpec((tb, LATENT), lambda i: (i, 0)),
            ),
        ),
        compiler_params=pltpu.CompilerParams(
            dimension_semantics=("parallel",)),
    )(x, eps, param_slab)
    return recon, mu, lv, z


# ---------------- deterministic parameter init (PyTorch nn.Linear default) ----------------
def init_linear(key, in_size, out_size):
    """kaiming_uniform_(a=sqrt(5)) weight bound = 1/sqrt(in); uniform bias 1/sqrt(in).
    Weight stored as (in, out) so the kernel computes x @ W + b."""
    kw, kb = jax.random.split(key)
    bound = 1.0 / math.sqrt(in_size)
    w = jax.random.uniform(kw, (in_size, out_size), jnp.float32,
                           minval=-bound, maxval=bound)
    b = jax.random.uniform(kb, (1, out_size), jnp.float32,
                           minval=-bound, maxval=bound)
    return w, b


def make_params(key):
    keys = jax.random.split(key, 5)
    ew0, eb0 = init_linear(keys[0], ENC_IN, ENC_HID)     # encoder L0
    wm, bm = init_linear(keys[1], ENC_HID, LATENT)       # linear_means
    wv, bv = init_linear(keys[2], ENC_HID, LATENT)       # linear_log_var
    dw0, db0 = init_linear(keys[3], LATENT, DEC_HID)     # decoder L0
    dw1, db1 = init_linear(keys[4], DEC_HID, DEC_OUT)    # decoder L1 (sigmoid)
    return (ew0, eb0, wm, bm, wv, bv, dw0, db0, dw1, db1)


def pack_params(params):
    """Pack all weights/biases into one lane-padded [P_ROWS, 128] f32 slab."""
    ew0, eb0, wm, bm, wv, bv, dw0, db0, dw1, db1 = params
    wh = jnp.concatenate([wm, wv], axis=1)     # (32, 2*LATENT) fused head weight
    bh = jnp.concatenate([bm, bv], axis=1)     # (1, 2*LATENT) fused head bias
    slab = jnp.zeros((P_ROWS, P_LANES), jnp.float32)
    slab = slab.at[EW0_R0:EW0_R0 + ENC_IN, 0:ENC_HID].set(ew0)
    slab = slab.at[WH_R0:WH_R0 + ENC_HID, 0:2 * LATENT].set(wh)
    slab = slab.at[DW0_R0:DW0_R0 + LATENT, 0:DEC_HID].set(dw0)
    slab = slab.at[DW1_R0:DW1_R0 + DEC_HID, 0:DEC_OUT].set(dw1)
    slab = slab.at[B_R0 + 0, 0:ENC_HID].set(eb0[0])
    slab = slab.at[B_R0 + 1, 0:2 * LATENT].set(bh[0])
    slab = slab.at[B_R0 + 2, 0:DEC_HID].set(db0[0])
    slab = slab.at[B_R0 + 3, 0:DEC_OUT].set(db1[0])
    return slab


# ---------------- pure-JAX reference (sanity check) ----------------
def vae_forward_ref(x, eps, params):
    """Reference on the same bf16-quantized activations the kernel sees."""
    ew0, eb0, wm, bm, wv, bv, dw0, db0, dw1, db1 = params
    dot = lambda a, b: jnp.dot(a, b, precision=jax.lax.Precision.HIGHEST)
    x = x.astype(jnp.bfloat16).astype(jnp.float32)
    eps = eps.astype(jnp.bfloat16).astype(jnp.float32)
    h = jnp.maximum(dot(x, ew0) + eb0, 0.0)
    mu = dot(h, wm) + bm
    lv = dot(h, wv) + bv
    z = mu + eps * jnp.exp(0.5 * lv)
    d = jnp.maximum(dot(z, dw0) + db0, 0.0)
    recon = jax.nn.sigmoid(dot(d, dw1) + db1)
    return recon, mu, lv, z


if __name__ == "__main__":
    BATCH = 128   # small demo; _pick_tb -> tb=64, grid of 2 batch tiles
    root = jax.random.PRNGKey(0)
    k_x, k_eps, k_p = jax.random.split(root, 3)

    x_f32 = jax.random.normal(k_x, (BATCH, ENC_IN), jnp.float32)
    eps_f32 = jax.random.normal(k_eps, (BATCH, LATENT), jnp.float32)  # torch.randn_like(std)
    # streaming tensors live in bf16 at the HBM boundary
    x = x_f32.astype(jnp.bfloat16)
    eps = eps_f32.astype(jnp.bfloat16)

    params = make_params(k_p)
    param_slab = pack_params(params)

    recon_x, means, log_var, z = vae_forward(x, eps, param_slab)
    jax.block_until_ready((recon_x, means, log_var, z))

    # correctness check against pure-JAX reference (same bf16-quantized inputs)
    r_ref, m_ref, v_ref, z_ref = vae_forward_ref(x_f32, eps_f32, params)
    assert jnp.allclose(means, m_ref, atol=1e-3, rtol=1e-3)
    assert jnp.allclose(log_var, v_ref, atol=1e-3, rtol=1e-3)
    assert jnp.allclose(z, z_ref, atol=1e-3, rtol=1e-3)
    # recon is returned in bf16 -> tolerance covers bf16 quantization of [0,1] values
    assert jnp.allclose(recon_x.astype(jnp.float32), r_ref, atol=8e-3)

    print("KERNEL_OK")
</pallas_src>

<mosaic_0001>
module attributes {stable_mosaic.version = 11 : i64} {
  func.func @vae_fwd_kernel(%arg0: i32, %arg1: memref<64x64xbf16, #tpu.memory_space<vmem>>, %arg2: memref<64x16xbf16, #tpu.memory_space<vmem>>, %arg3: memref<152x128xf32, #tpu.memory_space<vmem>>, %arg4: memref<64x64xbf16, #tpu.memory_space<vmem>>, %arg5: memref<64x16xf32, #tpu.memory_space<vmem>>, %arg6: memref<64x16xf32, #tpu.memory_space<vmem>>, %arg7: memref<64x16xf32, #tpu.memory_space<vmem>>) attributes {dimension_semantics = [#tpu.dimension_semantics<parallel>], iteration_bounds = array<i64: 2>, scalar_prefetch = 0 : i64, scratch_operands = 0 : i64, tpu.core_type = #tpu.core_type<tc>, window_params = [{transform_indices = @transform_0, window_bounds = array<i64: 64, 64>}, {transform_indices = @transform_1, window_bounds = array<i64: 64, 16>}, {pipeline_mode = #tpu.pipeline_mode<synchronous>, transform_indices = @transform_2, window_bounds = array<i64: 152, 128>}, {transform_indices = @transform_3, window_bounds = array<i64: 64, 64>}, {transform_indices = @transform_4, window_bounds = array<i64: 64, 16>}, {transform_indices = @transform_5, window_bounds = array<i64: 64, 16>}, {transform_indices = @transform_6, window_bounds = array<i64: 64, 16>}]} {
    %c0 = arith.constant 0 : index
    %c0_0 = arith.constant 0 : index
    %0 = vector.load %arg1[%c0, %c0_0] : memref<64x64xbf16, #tpu.memory_space<vmem>>, vector<64x64xbf16>
    %1 = arith.extf %0 : vector<64x64xbf16> to vector<64x64xf32>
    %c0_1 = arith.constant 0 : index
    %c0_2 = arith.constant 0 : index
    %2 = vector.load %arg2[%c0_1, %c0_2] : memref<64x16xbf16, #tpu.memory_space<vmem>>, vector<64x16xbf16>
    %3 = arith.extf %2 : vector<64x16xbf16> to vector<64x16xf32>
    %c0_3 = arith.constant 0 : index
    %c0_4 = arith.constant 0 : index
    %4 = vector.load %arg3[%c0_3, %c0_4] : memref<152x128xf32, #tpu.memory_space<vmem>>, vector<64x32xf32>
    %c64 = arith.constant 64 : index
    %c0_5 = arith.constant 0 : index
    %5 = vector.load %arg3[%c64, %c0_5] : memref<152x128xf32, #tpu.memory_space<vmem>>, vector<32x32xf32>
    %c96 = arith.constant 96 : index
    %c0_6 = arith.constant 0 : index
    %6 = vector.load %arg3[%c96, %c0_6] : memref<152x128xf32, #tpu.memory_space<vmem>>, vector<16x32xf32>
    %c112 = arith.constant 112 : index
    %c0_7 = arith.constant 0 : index
    %7 = vector.load %arg3[%c112, %c0_7] : memref<152x128xf32, #tpu.memory_space<vmem>>, vector<32x64xf32>
    %c144 = arith.constant 144 : index
    %c0_8 = arith.constant 0 : index
    %8 = vector.load %arg3[%c144, %c0_8] : memref<152x128xf32, #tpu.memory_space<vmem>>, vector<1x32xf32>
    %c145 = arith.constant 145 : index
    %c0_9 = arith.constant 0 : index
    %9 = vector.load %arg3[%c145, %c0_9] : memref<152x128xf32, #tpu.memory_space<vmem>>, vector<1x32xf32>
    %c146 = arith.constant 146 : index
    %c0_10 = arith.constant 0 : index
    %10 = vector.load %arg3[%c146, %c0_10] : memref<152x128xf32, #tpu.memory_space<vmem>>, vector<1x32xf32>
    %c147 = arith.constant 147 : index
    %c0_11 = arith.constant 0 : index
    %11 = vector.load %arg3[%c147, %c0_11] : memref<152x128xf32, #tpu.memory_space<vmem>>, vector<1x64xf32>
    %cst = arith.constant dense<0.000000e+00> : vector<64x32xf32>
    %12 = tpu.matmul %1, %4, %cst {dimension_numbers = #tpu.dot_dimension_numbers<[1], [0], [0], [1], [0, 0, 1, 1], [], []>} : vector<64x64xf32>, vector<64x32xf32>, vector<64x32xf32> -> vector<64x32xf32>
    %13 = vector.broadcast %8 : vector<1x32xf32> to vector<64x32xf32>
    %14 = arith.addf %12, %13 : vector<64x32xf32>
    %cst_12 = arith.constant 0.000000e+00 : f32
    %15 = vector.broadcast %cst_12 : f32 to vector<64x32xf32>
    %16 = arith.maximumf %14, %15 : vector<64x32xf32>
    %cst_13 = arith.constant dense<0.000000e+00> : vector<64x32xf32>
    %17 = tpu.matmul %16, %5, %cst_13 {dimension_numbers = #tpu.dot_dimension_numbers<[1], [0], [0], [1], [0, 0, 1, 1], [], []>} : vector<64x32xf32>, vector<32x32xf32>, vector<64x32xf32> -> vector<64x32xf32>
    %18 = vector.broadcast %9 : vector<1x32xf32> to vector<64x32xf32>
    %19 = arith.addf %17, %18 : vector<64x32xf32>
    %20 = vector.extract_strided_slice %19 {offsets = [0, 0], sizes = [64, 16], strides = [1, 1]} : vector<64x32xf32> to vector<64x16xf32>
    %21 = vector.extract_strided_slice %19 {offsets = [0, 16], sizes = [64, 16], strides = [1, 1]} : vector<64x32xf32> to vector<64x16xf32>
    %cst_14 = arith.constant 5.000000e-01 : f32
    %22 = vector.broadcast %cst_14 : f32 to vector<64x16xf32>
    %23 = arith.mulf %22, %21 : vector<64x16xf32>
    %24 = math.exp %23 : vector<64x16xf32>
    %25 = arith.mulf %3, %24 : vector<64x16xf32>
    %26 = arith.addf %20, %25 : vector<64x16xf32>
    %cst_15 = arith.constant dense<0.000000e+00> : vector<64x32xf32>
    %27 = tpu.matmul %26, %6, %cst_15 {dimension_numbers = #tpu.dot_dimension_numbers<[1], [0], [0], [1], [0, 0, 1, 1], [], []>} : vector<64x16xf32>, vector<16x32xf32>, vector<64x32xf32> -> vector<64x32xf32>
    %28 = vector.broadcast %10 : vector<1x32xf32> to vector<64x32xf32>
    %29 = arith.addf %27, %28 : vector<64x32xf32>
    %cst_16 = arith.constant 0.000000e+00 : f32
    %30 = vector.broadcast %cst_16 : f32 to vector<64x32xf32>
    %31 = arith.maximumf %29, %30 : vector<64x32xf32>
    %cst_17 = arith.constant dense<0.000000e+00> : vector<64x64xf32>
    %32 = tpu.matmul %31, %7, %cst_17 {dimension_numbers = #tpu.dot_dimension_numbers<[1], [0], [0], [1], [0, 0, 1, 1], [], []>} : vector<64x32xf32>, vector<32x64xf32>, vector<64x64xf32> -> vector<64x64xf32>
    %33 = vector.broadcast %11 : vector<1x64xf32> to vector<64x64xf32>
    %34 = arith.addf %32, %33 : vector<64x64xf32>
    %cst_18 = arith.constant 5.000000e-01 : f32
    %35 = vector.broadcast %cst_18 : f32 to vector<64x64xf32>
    %36 = arith.mulf %35, %34 : vector<64x64xf32>
    %37 = math.tanh %36 : vector<64x64xf32>
    %cst_19 = arith.constant 5.000000e-01 : f32
    %38 = vector.broadcast %cst_19 : f32 to vector<64x64xf32>
    %39 = arith.mulf %38, %37 : vector<64x64xf32>
    %cst_20 = arith.constant 5.000000e-01 : f32
    %40 = vector.broadcast %cst_20 : f32 to vector<64x64xf32>
    %41 = arith.addf %39, %40 : vector<64x64xf32>
    %42 = arith.truncf %41 : vector<64x64xf32> to vector<64x64xbf16>
    %c0_21 = arith.constant 0 : index
    %c0_22 = arith.constant 0 : index
    %43 = vector.load %arg4[%c0_21, %c0_22] : memref<64x64xbf16, #tpu.memory_space<vmem>>, vector<64x64xbf16>
    tpu.vector_store %arg4[%c0_21, %c0_22], %42 {strides = array<i32>} : memref<64x64xbf16, #tpu.memory_space<vmem>>, vector<64x64xbf16>,
    %c0_23 = arith.constant 0 : index
    %c0_24 = arith.constant 0 : index
    %44 = vector.load %arg5[%c0_23, %c0_24] : memref<64x16xf32, #tpu.memory_space<vmem>>, vector<64x16xf32>
    tpu.vector_store %arg5[%c0_23, %c0_24], %20 {strides = array<i32>} : memref<64x16xf32, #tpu.memory_space<vmem>>, vector<64x16xf32>,
    %c0_25 = arith.constant 0 : index
    %c0_26 = arith.constant 0 : index
    %45 = vector.load %arg6[%c0_25, %c0_26] : memref<64x16xf32, #tpu.memory_space<vmem>>, vector<64x16xf32>
    tpu.vector_store %arg6[%c0_25, %c0_26], %21 {strides = array<i32>} : memref<64x16xf32, #tpu.memory_space<vmem>>, vector<64x16xf32>,
    %c0_27 = arith.constant 0 : index
    %c0_28 = arith.constant 0 : index
    %46 = vector.load %arg7[%c0_27, %c0_28] : memref<64x16xf32, #tpu.memory_space<vmem>>, vector<64x16xf32>
    tpu.vector_store %arg7[%c0_27, %c0_28], %26 {strides = array<i32>} : memref<64x16xf32, #tpu.memory_space<vmem>>, vector<64x16xf32>,
    return
  }
  func.func @transform_0(%arg0: i32) -> (i32, i32) {
    %c0_i32 = arith.constant 0 : i32
    %c0_i32_0 = arith.constant 0 : i32
    return %arg0, %c0_i32 : i32, i32
  }
  func.func @transform_1(%arg0: i32) -> (i32, i32) {
    %c0_i32 = arith.constant 0 : i32
    %c0_i32_0 = arith.constant 0 : i32
    return %arg0, %c0_i32 : i32, i32
  }
  func.func @transform_2(%arg0: i32) -> (i32, i32) {
    %c0_i32 = arith.constant 0 : i32
    %c0_i32_0 = arith.constant 0 : i32
    %c0_i32_1 = arith.constant 0 : i32
    return %c0_i32, %c0_i32_0 : i32, i32
  }
  func.func @transform_3(%arg0: i32) -> (i32, i32) {
    %c0_i32 = arith.constant 0 : i32
    %c0_i32_0 = arith.constant 0 : i32
    return %arg0, %c0_i32 : i32, i32
  }
  func.func @transform_4(%arg0: i32) -> (i32, i32) {
    %c0_i32 = arith.constant 0 : i32
    %c0_i32_0 = arith.constant 0 : i32
    return %arg0, %c0_i32 : i32, i32
  }
  func.func @transform_5(%arg0: i32) -> (i32, i32) {
    %c0_i32 = arith.constant 0 : i32
    %c0_i32_0 = arith.constant 0 : i32
    return %arg0, %c0_i32 : i32, i32
  }
  func.func @transform_6(%arg0: i32) -> (i32, i32) {
    %c0_i32 = arith.constant 0 : i32
    %c0_i32_0 = arith.constant 0 : i32
    return %arg0, %c0_i32 : i32, i32
  }
}

</mosaic_0001>

<llo_original>
// kernel: tpu_custom_call.1
$region0: #{tpu_custom_call.1}
  #allocation0 [shape = 'u32[]', space=smem, size = 0x4, offset = 0x4, fixed_abs, tag = 'smem constant byte address 0x4 - core index']
  #allocation1 [shape = 'u32[144,128]{1,0:T(1,128)}', space=vmem, size = 0x12000, scoped, tag = 'internal scratch']
  %s0 = inlined_call_operand.vmem [shape: bf16[128,64], index: 0, kind: input, shape index: {}]
  %s1 = inlined_call_operand.vmem [shape: bf16[128,16], index: 1, kind: input, shape index: {}]
  %s2 = inlined_call_operand.vmem [shape: f32[152,128], index: 2, kind: input, shape index: {}]
  %s3 = inlined_call_operand.vmem [shape: bf16[128,64], index: 3, kind: output, shape index: {0}]
  %s4 = inlined_call_operand.vmem [shape: f32[128,16], index: 4, kind: output, shape index: {1}]
  %s5 = inlined_call_operand.vmem [shape: f32[128,16], index: 5, kind: output, shape index: {2}]
  %s6 = inlined_call_operand.vmem [shape: f32[128,16], index: 6, kind: output, shape index: {3}]
  %7 = xla_tuple %s3, %s4, %s5, %s6
  %s8 = sld [smem:[#allocation0]]
  $region69: #{tpu_custom_call.1} parent=0
    _
  %s10 = ssub.s32 1, %s8
  %s11 = scalar_select 0, %s10, %s8
  loop: start=0, step=1, limit=4
  $region2: #{tpu_custom_call.1} parent=0 // loop_pre_header
    _
  $region3: #{tpu_custom_call.1} parent=0 // loop_header
    %s13 = sphi 0, %s17
    %p14 = scmp.ge.s32.totalorder %s13, 4
    %s23 = sphi 0, %s25
    %s26 = sphi 0, %s23
    %s27 = sphi 0, %s26
    %s43 = sphi 0, %s27
    %s49 = sphi 0, %s51
    %s52 = sphi 0, %s49
    %s53 = sphi 0, %s52
    %s69 = sphi 0, %s53
    %s73 = sphi 0, %s73
    %s75 = sphi 0, %s73
    %s76 = sphi 0, %s75
    %s90 = sphi 0, %s76
    %s96 = sphi 0, %s98
    %s99 = sphi 0, %s96
    %s100 = sphi 0, %s99
    %s116 = sphi 0, %s100
    %s122 = sphi 0, %s124
    %s125 = sphi 0, %s122
    %s126 = sphi 0, %s125
    %s142 = sphi 0, %s126
    %s148 = sphi 0, %s150
    %s151 = sphi 0, %s148
    %s152 = sphi 0, %s151
    %s168 = sphi 0, %s152
    %s174 = sphi 0, %s176
    %s177 = sphi 0, %s174
    %s178 = sphi 0, %s177
    %s194 = sphi 0, %s178
  $region4: #{tpu_custom_call.1} parent=0 // loop_header_branch
    %16 = sbr.rel (%p14) target = $region8
  $region5: #{tpu_custom_call.1} parent=0 // loop_body
    %s18 = ssub.s32 %s13, 1
    %s19 = ssub.s32 %s13, 2
    %s20 = sadd.s32 %s13, 1
    %s21 = ssub.s32 %s13, %s20
    %p22 = scmp.eq.s32.totalorder %s21, 0
    %s24 = sadd.s32 %s23, 1
    %s25 = scalar_select %p22, %s23, %s24
    %p28 = pneg %p22
    %p29 = scmp.eq.s32.totalorder %s13, 1
    %p30 = por %p28, %p29
    %p31 = scmp.ne.s32.totalorder %s23, %s26
    %p32 = scmp.eq.s32.totalorder %s13, 0
    %p33 = por %p31, %p32
    %p34 = scmp.ne.s32.totalorder %s23, %s26
    %p35 = scmp.eq.s32.totalorder %s18, 1
    %p36 = por %p34, %p35
    %p37 = scmp.ne.s32.totalorder %s26, %s27
    %p38 = scmp.eq.s32.totalorder %s18, 0
    %p39 = por %p37, %p38
    %p40 = scmp.ne.s32.totalorder %s26, %s27
    %p41 = scmp.eq.s32.totalorder %s19, 1
    %p42 = por %p40, %p41
    %p44 = scmp.ne.s32.totalorder %s27, %s43
    %p45 = scmp.eq.s32.totalorder %s19, 0
    %p46 = por %p44, %p45
    %s47 = ssub.s32 %s13, %s20
    %p48 = scmp.eq.s32.totalorder %s47, 0
    %s50 = sadd.s32 %s49, 1
    %s51 = scalar_select %p48, %s49, %s50
    %p54 = pneg %p48
    %p55 = scmp.eq.s32.totalorder %s13, 1
    %p56 = por %p54, %p55
    %p57 = scmp.ne.s32.totalorder %s49, %s52
    %p58 = scmp.eq.s32.totalorder %s13, 0
    %p59 = por %p57, %p58
    %p60 = scmp.ne.s32.totalorder %s49, %s52
    %p61 = scmp.eq.s32.totalorder %s18, 1
    %p62 = por %p60, %p61
    %p63 = scmp.ne.s32.totalorder %s52, %s53
    %p64 = scmp.eq.s32.totalorder %s18, 0
    %p65 = por %p63, %p64
    %p66 = scmp.ne.s32.totalorder %s52, %s53
    %p67 = scmp.eq.s32.totalorder %s19, 1
    %p68 = por %p66, %p67
    %p70 = scmp.ne.s32.totalorder %s53, %s69
    %p71 = scmp.eq.s32.totalorder %s19, 0
    %p72 = por %p70, %p71
    %s74 = sadd.s32 %s73, 1
    %p77 = scmp.eq.s32.totalorder %s13, 1
    %p78 = scmp.ne.s32.totalorder %s73, %s75
    %p79 = scmp.eq.s32.totalorder %s13, 0
    %p80 = por %p78, %p79
    %p81 = scmp.ne.s32.totalorder %s73, %s75
    %p82 = scmp.eq.s32.totalorder %s18, 1
    %p83 = por %p81, %p82
    %p84 = scmp.ne.s32.totalorder %s75, %s76
    %p85 = scmp.eq.s32.totalorder %s18, 0
    %p86 = por %p84, %p85
    %p87 = scmp.ne.s32.totalorder %s75, %s76
    %p88 = scmp.eq.s32.totalorder %s19, 1
    %p89 = por %p87, %p88
    %p91 = scmp.ne.s32.totalorder %s76, %s90
    %p92 = scmp.eq.s32.totalorder %s19, 0
    %p93 = por %p91, %p92
    %s94 = ssub.s32 %s13, %s20
    %p95 = scmp.eq.s32.totalorder %s94, 0
    %s97 = sadd.s32 %s96, 1
    %s98 = scalar_select %p95, %s96, %s97
    %p101 = pneg %p95
    %p102 = scmp.eq.s32.totalorder %s13, 1
    %p103 = por %p101, %p102
    %p104 = scmp.ne.s32.totalorder %s96, %s99
    %p105 = scmp.eq.s32.totalorder %s13, 0
    %p106 = por %p104, %p105
    %p107 = scmp.ne.s32.totalorder %s96, %s99
    %p108 = scmp.eq.s32.totalorder %s18, 1
    %p109 = por %p107, %p108
    %p110 = scmp.ne.s32.totalorder %s99, %s100
    %p111 = scmp.eq.s32.totalorder %s18, 0
    %p112 = por %p110, %p111
    %p113 = scmp.ne.s32.totalorder %s99, %s100
    %p114 = scmp.eq.s32.totalorder %s19, 1
    %p115 = por %p113, %p114
    %p117 = scmp.ne.s32.totalorder %s100, %s116
    %p118 = scmp.eq.s32.totalorder %s19, 0
    %p119 = por %p117, %p118
    %s120 = ssub.s32 %s13, %s20
    %p121 = scmp.eq.s32.totalorder %s120, 0
    %s123 = sadd.s32 %s122, 1
    %s124 = scalar_select %p121, %s122, %s123
    %p127 = pneg %p121
    %p128 = scmp.eq.s32.totalorder %s13, 1
    %p129 = por %p127, %p128
    %p130 = scmp.ne.s32.totalorder %s122, %s125
    %p131 = scmp.eq.s32.totalorder %s13, 0
    %p132 = por %p130, %p131
    %p133 = scmp.ne.s32.totalorder %s122, %s125
    %p134 = scmp.eq.s32.totalorder %s18, 1
    %p135 = por %p133, %p134
    %p136 = scmp.ne.s32.totalorder %s125, %s126
    %p137 = scmp.eq.s32.totalorder %s18, 0
    %p138 = por %p136, %p137
    %p139 = scmp.ne.s32.totalorder %s125, %s126
    %p140 = scmp.eq.s32.totalorder %s19, 1
    %p141 = por %p139, %p140
    %p143 = scmp.ne.s32.totalorder %s126, %s142
    %p144 = scmp.eq.s32.totalorder %s19, 0
    %p145 = por %p143, %p144
    %s146 = ssub.s32 %s13, %s20
    %p147 = scmp.eq.s32.totalorder %s146, 0
    %s149 = sadd.s32 %s148, 1
    %s150 = scalar_select %p147, %s148, %s149
    %p153 = pneg %p147
    %p154 = scmp.eq.s32.totalorder %s13, 1
    %p155 = por %p153, %p154
    %p156 = scmp.ne.s32.totalorder %s148, %s151
    %p157 = scmp.eq.s32.totalorder %s13, 0
    %p158 = por %p156, %p157
    %p159 = scmp.ne.s32.totalorder %s148, %s151
    %p160 = scmp.eq.s32.totalorder %s18, 1
    %p161 = por %p159, %p160
    %p162 = scmp.ne.s32.totalorder %s151, %s152
    %p163 = scmp.eq.s32.totalorder %s18, 0
    %p164 = por %p162, %p163
    %p165 = scmp.ne.s32.totalorder %s151, %s152
    %p166 = scmp.eq.s32.totalorder %s19, 1
    %p167 = por %p165, %p166
    %p169 = scmp.ne.s32.totalorder %s152, %s168
    %p170 = scmp.eq.s32.totalorder %s19, 0
    %p171 = por %p169, %p170
    %s172 = ssub.s32 %s13, %s20
    %p173 = scmp.eq.s32.totalorder %s172, 0
    %s175 = sadd.s32 %s174, 1
    %s176 = scalar_select %p173, %s174, %s175
    %p179 = pneg %p173
    %p180 = scmp.eq.s32.totalorder %s13, 1
    %p181 = por %p179, %p180
    %p182 = scmp.ne.s32.totalorder %s174, %s177
    %p183 = scmp.eq.s32.totalorder %s13, 0
    %p184 = por %p182, %p183
    %p185 = scmp.ne.s32.totalorder %s174, %s177
    %p186 = scmp.eq.s32.totalorder %s18, 1
    %p187 = por %p185, %p186
    %p188 = scmp.ne.s32.totalorder %s177, %s178
    %p189 = scmp.eq.s32.totalorder %s18, 0
    %p190 = por %p188, %p189
    %p191 = scmp.ne.s32.totalorder %s177, %s178
    %p192 = scmp.eq.s32.totalorder %s19, 1
    %p193 = por %p191, %p192
    %p195 = scmp.ne.s32.totalorder %s178, %s194
    %p196 = scmp.eq.s32.totalorder %s19, 0
    %p197 = por %p195, %p196
    %p198 = scmp.le.s32.totalorder 1, %s13
    %p199 = scmp.lt.s32.totalorder %s13, 3
    %p200 = pnand %p198, %p199
    %p201 = pneg %p200
    // Predicated region
    $region9: #{tpu_custom_call.1} parent=5 // pred_check
      _
    $region10: #{tpu_custom_call.1} parent=5 // pred_check_branch
      %203 = sbr.rel (%p200) target = $region12
    $region11: #{tpu_custom_call.1} parent=5 // pred_region
      %s204 = ssub.s32 %s13, 1
      // Predicated region
      $region13: #{tpu_custom_call.1} parent=11 // pred_check
        %p205 = pneg %p86
      $region14: #{tpu_custom_call.1} parent=11 // pred_check_branch
        %207 = sbr.rel (%p205) target = $region16
      $region15: #{tpu_custom_call.1} parent=11 // pred_region
        _
      $region16: #{tpu_custom_call.1} parent=11 // pred_fallthru
        _
    $region12: #{tpu_custom_call.1} parent=5 // pred_fallthru
      _
    %p208 = scmp.lt.s32.totalorder %s13, 2
    // Predicated region
    $region17: #{tpu_custom_call.1} parent=5 // pred_check
      %p209 = pneg %p208
    $region18: #{tpu_custom_call.1} parent=5 // pred_check_branch
      %211 = sbr.rel (%p209) target = $region20
    $region19: #{tpu_custom_call.1} parent=5 // pred_region
      // Predicated region
      $region21: #{tpu_custom_call.1} parent=19 // pred_check
        %p212 = pneg %p33
      $region22: #{tpu_custom_call.1} parent=19 // pred_check_branch
        %214 = sbr.rel (%p212) target = $region24
      $region23: #{tpu_custom_call.1} parent=19 // pred_region
        %s215 = smul.u32 8, %s13
        %p216 = scmp.lt.s32.totalorder %s215, 15
        %s217 = scalar_select %p216, %s215, 15
        %s218 = smul.addr %s217, 4
        %s219 = scalar_lea.vmem %s0, %s218
        %s220 = smul.u32 8, %s13
      $region24: #{tpu_custom_call.1} parent=19 // pred_fallthru
        _
      // Predicated region
      $region25: #{tpu_custom_call.1} parent=19 // pred_check
        %p221 = pneg %p59
      $region26: #{tpu_custom_call.1} parent=19 // pred_check_branch
        %223 = sbr.rel (%p221) target = $region28
      $region27: #{tpu_custom_call.1} parent=19 // pred_region
        %s224 = smul.u32 8, %s13
        %p225 = scmp.lt.s32.totalorder %s224, 15
        %s226 = scalar_select %p225, %s224, 15
        %s227 = smul.addr %s226, 4
        %s228 = scalar_lea.vmem %s1, %s227
        %s229 = smul.u32 8, %s13
      $region28: #{tpu_custom_call.1} parent=19 // pred_fallthru
        _
    $region20: #{tpu_custom_call.1} parent=5 // pred_fallthru
      _
    %p230 = scmp.le.s32.totalorder 1, %s13
    %p231 = scmp.lt.s32.totalorder %s13, 3
    %p232 = pnand %p230, %p231
    %p233 = pneg %p232
    // Predicated region
    $region29: #{tpu_custom_call.1} parent=5 // pred_check
      _
    $region30: #{tpu_custom_call.1} parent=5 // pred_check_branch
      %235 = sbr.rel (%p232) target = $region32
    $region31: #{tpu_custom_call.1} parent=5 // pred_region
      %s236 = ssub.s32 %s13, 1
      %s237 = smul.u32 8, %s18
      %p238 = scmp.lt.s32.totalorder %s237, 15
      %s239 = scalar_select %p238, %s237, 15
      %s240 = smul.addr %s239, 4
      %s241 = scalar_lea.vmem %s0, %s240
      %p242 = pneg %p39
      %p243 = pneg %p36
      %s244 = smul.u32 8, %s18
      %p245 = scmp.lt.s32.totalorder %s244, 15
      %s246 = scalar_select %p245, %s244, 15
      %s247 = smul.addr %s246, 4
      %s248 = scalar_lea.vmem %s1, %s247
      %p249 = pneg %p65
      %p250 = pneg %p62
      %p251 = pneg %p86
      %p252 = pneg %p83
      %p253 = pneg %p112
      %p254 = pneg %p109
      %s255 = smul.u32 8, %s18
      %p256 = scmp.lt.s32.totalorder %s255, 15
      %s257 = scalar_select %p256, %s255, 15
      %s258 = smul.addr %s257, 4
      %s259 = scalar_lea.vmem %s3, %s258
      %p260 = pneg %p138
      %p261 = pneg %p135
      %s262 = smul.u32 8, %s18
      %p263 = scmp.lt.s32.totalorder %s262, 15
      %s264 = scalar_select %p263, %s262, 15
      %s265 = smul.addr %s264, 8
      %s266 = scalar_lea.vmem %s4, %s265
      %p267 = pneg %p164
      %p268 = pneg %p161
      %s269 = smul.u32 8, %s18
      %p270 = scmp.lt.s32.totalorder %s269, 15
      %s271 = scalar_select %p270, %s269, 15
      %s272 = smul.addr %s271, 8
      %s273 = scalar_lea.vmem %s5, %s272
      %p274 = pneg %p190
      %p275 = pneg %p187
      %s276 = smul.u32 8, %s18
      %p277 = scmp.lt.s32.totalorder %s276, 15
      %s278 = scalar_select %p277, %s276, 15
      %s279 = smul.addr %s278, 8
      %s280 = scalar_lea.vmem %s6, %s279
      %s281 = smul.u32 8, %s18
      %p282 = scmp.lt.s32.totalorder %s281, 15
      %s283 = scalar_select %p282, %s281, 15
      %s284 = smul.addr %s283, 4
      %s285 = scalar_lea.vmem %s0, %s284
      %s286 = smul.u32 8, %s18
      %s287 = smul.u32 8, %s18
      %p288 = scmp.lt.s32.totalorder %s287, 15
      %s289 = scalar_select %p288, %s287, 15
      %s290 = smul.addr %s289, 4
      %s291 = scalar_lea.vmem %s1, %s290
      %s292 = smul.u32 8, %s18
      %s293 = smul.u32 8, %s18
      %p294 = scmp.lt.s32.totalorder %s293, 15
      %s295 = scalar_select %p294, %s293, 15
      %s296 = smul.addr %s295, 4
      %s297 = scalar_lea.vmem %s3, %s296
      %s298 = smul.u32 8, %s18
      %s299 = smul.u32 8, %s18
      %p300 = scmp.lt.s32.totalorder %s299, 15
      %s301 = scalar_select %p300, %s299, 15
      %s302 = smul.addr %s301, 8
      %s303 = scalar_lea.vmem %s4, %s302
      %s304 = smul.u32 8, %s18
      %s305 = smul.u32 8, %s18
      %p306 = scmp.lt.s32.totalorder %s305, 15
      %s307 = scalar_select %p306, %s305, 15
      %s308 = smul.addr %s307, 8
      %s309 = scalar_lea.vmem %s5, %s308
      %s310 = smul.u32 8, %s18
      %s311 = smul.u32 8, %s18
      %p312 = scmp.lt.s32.totalorder %s311, 15
      %s313 = scalar_select %p312, %s311, 15
      %s314 = smul.addr %s313, 8
      %s315 = scalar_lea.vmem %s6, %s314
      %s316 = smul.u32 8, %s18
      %v317 = vld [vmem:[%s285] sm:$0xf]
      %v318 = vld [vmem:[%s285 + $0x4] sm:$0xf]
      %v319 = vld [vmem:[%s285 + $0x8] sm:$0xf]
      %v320 = vld [vmem:[%s285 + $0xc] sm:$0xf]
      %v321 = vld [vmem:[%s285 + $0x10] sm:$0xf]
      %v322 = vld [vmem:[%s285 + $0x14] sm:$0xf]
      %v323 = vld [vmem:[%s285 + $0x18] sm:$0xf]
      %v324 = vld [vmem:[%s285 + $0x1c] sm:$0xf]
      %v325 = vunpack.c.l.bf16 %v317
      %v326 = vunpack.c.l.bf16 %v318
      %v327 = vunpack.c.l.bf16 %v319
      %v328 = vunpack.c.l.bf16 %v320
      %v329 = vunpack.c.l.bf16 %v321
      %v330 = vunpack.c.l.bf16 %v322
      %v331 = vunpack.c.l.bf16 %v323
      %v332 = vunpack.c.l.bf16 %v324
      %v333 = vld [vmem:[%s291] sm:$0xf]
      %v334 = vld [vmem:[%s291 + $0x4] sm:$0xf]
      %v335 = vld [vmem:[%s291 + $0x8] sm:$0xf]
      %v336 = vld [vmem:[%s291 + $0xc] sm:$0xf]
      %v337 = vld [vmem:[%s291 + $0x10] sm:$0xf]
      %v338 = vld [vmem:[%s291 + $0x14] sm:$0xf]
      %v339 = vld [vmem:[%s291 + $0x18] sm:$0xf]
      %v340 = vld [vmem:[%s291 + $0x1c] sm:$0xf]
      %v341 = vunpack.c.l.bf16 %v333
      %v342 = vunpack.c.l.bf16 %v334
      %v343 = vunpack.c.l.bf16 %v335
      %v344 = vunpack.c.l.bf16 %v336
      %v345 = vunpack.c.l.bf16 %v337
      %v346 = vunpack.c.l.bf16 %v338
      %v347 = vunpack.c.l.bf16 %v339
      %v348 = vunpack.c.l.bf16 %v340
      %v349 = vld [vmem:[%s2] sm:$0xff]
      %v350 = vld [vmem:[%s2 + $0x8] sm:$0xff]
      %v351 = vld [vmem:[%s2 + $0x10] sm:$0xff]
      %v352 = vld [vmem:[%s2 + $0x18] sm:$0xff]
      %v353 = vld [vmem:[%s2 + $0x20] sm:$0xff]
      %v354 = vld [vmem:[%s2 + $0x28] sm:$0xff]
      %v355 = vld [vmem:[%s2 + $0x30] sm:$0xff]
      %v356 = vld [vmem:[%s2 + $0x38] sm:$0xff]
      %v357 = vld [vmem:[%s2 + $0x40] sm:$0xff]
      %v358 = vld [vmem:[%s2 + $0x48] sm:$0xff]
      %v359 = vld [vmem:[%s2 + $0x50] sm:$0xff]
      %v360 = vld [vmem:[%s2 + $0x58] sm:$0xff]
      %v361 = vld [vmem:[%s2 + $0x60] sm:$0xff]
      %v362 = vld [vmem:[%s2 + $0x68] sm:$0xff]
      %v363 = vld [vmem:[%s2 + $0x70] sm:$0xff]
      %v364 = vld [vmem:[%s2 + $0x78] sm:$0xff]
      %v365 = vld [vmem:[%s2 + $0x80] sm:$0xff]
      %v366 = vld [vmem:[%s2 + $0x88] sm:$0xff]
      %v367 = vld [vmem:[%s2 + $0x90] sm:$0x1]
      %v368 = vld [vmem:[%s2 + $0x91] sm:$0x1]
      %v369 = vld [vmem:[%s2 + $0x92] sm:$0x1]
      %v370 = vld [vmem:[%s2 + $0x93] sm:$0x1]
      %v371 = vlaneseq
      %v372 = vshrl.u32 %v371, 7
      %v373 = vsub.s32 0, %v372
      %v374 = vrot.slane %v367, %v373
      %vm375 = vcmask 523264
      %v377 = vsel %vm375, %v325, 0
      %v380 = vsel %vm375, %v326, 0
      %v383 = vsel %vm375, %v327, 0
      %v386 = vsel %vm375, %v328, 0
      %v389 = vsel %vm375, %v329, 0
      %v392 = vsel %vm375, %v330, 0
      %v395 = vsel %vm375, %v331, 0
      %v398 = vsel %vm375, %v332, 0
      %400 = vmatprep.subr.mxu0 0.0
      %401 = vmatpush1.msra.mxu0 %v349
      %402 = vmatprep.subr.mxu0 0.0
      %403 = vmatpush1.msra.mxu0 %v350
      %404 = vmatprep.subr.mxu0 0.0
      %405 = vmatpush1.msra.mxu0 %v351
      %406 = vmatprep.subr.mxu0 0.0
      %407 = vmatpush1.msra.mxu0 %v352
      %408 = vmatprep.subr.mxu0 0.0
      %409 = vmatpush1.msra.mxu0 %v353
      %410 = vmatprep.subr.mxu0 0.0
      %411 = vmatpush1.msra.mxu0 %v354
      %412 = vmatprep.subr.mxu0 0.0
      %413 = vmatpush1.msra.mxu0 %v355
      %414 = vmatprep.subr.mxu0 0.0
      %415 = vmatpush1.msra.mxu0 %v356
      %416 = vmatprep.subr.mxu0 0.0
      %417 = vmatpush1.msra.mxu0 0.0
      %418 = vmatprep.subr.mxu0 0.0
      %419 = vmatpush1.msra.mxu0 0.0
      %420 = vmatprep.subr.mxu0 0.0
      %421 = vmatpush1.msra.mxu0 0.0
      %422 = vmatprep.subr.mxu0 0.0
      %423 = vmatpush1.msra.mxu0 0.0
      %424 = vmatprep.subr.mxu0 0.0
      %425 = vmatpush1.msra.mxu0 0.0
      %426 = vmatprep.subr.mxu0 0.0
      %427 = vmatpush1.msra.mxu0 0.0
      %428 = vmatprep.subr.mxu0 0.0
      %429 = vmatpush1.msra.mxu0 0.0
      %430 = vmatprep.subr.mxu0 0.0
      %431 = vmatpush1.msra.mxu0 0.0
      %432 = vmatprep.subr.mxu0 0.0
      %433 = vmatpush1.msra.mxu0 0.0
      %434 = vmatprep.subr.mxu0 0.0
      %435 = vmatpush1.msra.mxu0 0.0
      %436 = vmatprep.subr.mxu0 0.0
      %437 = vmatpush1.msra.mxu0 0.0
      %438 = vmatprep.subr.mxu0 0.0
      %439 = vmatpush1.msra.mxu0 0.0
      %440 = vmatprep.subr.mxu0 0.0
      %441 = vmatpush1.msra.mxu0 0.0
      %442 = vmatprep.subr.mxu0 0.0
      %443 = vmatpush1.msra.mxu0 0.0
      %444 = vmatprep.subr.mxu0 0.0
      %445 = vmatpush1.msra.mxu0 0.0
      %446 = vmatprep.subr.mxu0 0.0
      %447 = vmatpush1.msra.mxu0 0.0
      %448 = vmatprep.subr.mxu0 0.0
      %449 = vmatpush1.msra.mxu0 0.0
      %450 = vmatprep.subr.mxu0 0.0
      %451 = vmatpush1.msra.mxu0 0.0
      %452 = vmatprep.subr.mxu0 0.0
      %453 = vmatpush1.msra.mxu0 0.0
      %454 = vmatprep.subr.mxu0 0.0
      %455 = vmatpush1.msra.mxu0 0.0
      %456 = vmatprep.subr.mxu0 0.0
      %457 = vmatpush1.msra.mxu0 0.0
      %458 = vmatprep.subr.mxu0 0.0
      %459 = vmatpush1.msra.mxu0 0.0
      %460 = vmatprep.subr.mxu0 0.0
      %461 = vmatpush1.msra.mxu0 0.0
      %462 = vmatprep.subr.mxu0 0.0
      %463 = vmatpush1.msra.mxu0 0.0
      %464 = vmatprep.mubr.f32.mxu0 0.0
      %465 = vmatmul.mubr.f32.gmra.mrb[0].mxu0 %v377
      %v466 = vpop.f32.mrb[0].mxu0
      %v467 = vadd.f32 %v374, %v466
      %v468 = vpop.f32.mrb[0].mxu0
      %469 = vmatprep.mubr.f32.mxu0 0.0
      %470 = vmatmul.mubr.f32.gmra.mrb[0].mxu0 %v380
      %v471 = vpop.f32.mrb[0].mxu0
      %v472 = vadd.f32 %v374, %v471
      %v473 = vpop.f32.mrb[0].mxu0
      %474 = vmatprep.mubr.f32.mxu0 0.0
      %475 = vmatmul.mubr.f32.gmra.mrb[0].mxu0 %v383
      %v476 = vpop.f32.mrb[0].mxu0
      %v477 = vadd.f32 %v374, %v476
      %v478 = vpop.f32.mrb[0].mxu0
      %479 = vmatprep.mubr.f32.mxu0 0.0
      %480 = vmatmul.mubr.f32.gmra.mrb[0].mxu0 %v386
      %v481 = vpop.f32.mrb[0].mxu0
      %v482 = vadd.f32 %v374, %v481
      %v483 = vpop.f32.mrb[0].mxu0
      %484 = vmatprep.mubr.f32.mxu0 0.0
      %485 = vmatmul.mubr.f32.gmra.mrb[0].mxu0 %v389
      %v486 = vpop.f32.mrb[0].mxu0
      %v487 = vadd.f32 %v374, %v486
      %v488 = vpop.f32.mrb[0].mxu0
      %489 = vmatprep.mubr.f32.mxu0 0.0
      %490 = vmatmul.mubr.f32.gmra.mrb[0].mxu0 %v392
      %v491 = vpop.f32.mrb[0].mxu0
      %v492 = vadd.f32 %v374, %v491
      %v493 = vpop.f32.mrb[0].mxu0
      %494 = vmatprep.mubr.f32.mxu0 0.0
      %495 = vmatmul.mubr.f32.gmra.mrb[0].mxu0 %v395
      %v496 = vpop.f32.mrb[0].mxu0
      %v497 = vadd.f32 %v374, %v496
      %v498 = vpop.f32.mrb[0].mxu0
      %499 = vmatprep.mubr.f32.mxu0 0.0
      %500 = vmatmul.mubr.f32.gmra.mrb[0].mxu0 %v398
      %v501 = vpop.f32.mrb[0].mxu0
      %v502 = vadd.f32 %v374, %v501
      %v503 = vpop.f32.mrb[0].mxu0
      %504 = vdwg.mxu0
      %v505 = vmax.f32 %v467, 0.0
      %v506 = vmax.f32 %v472, 0.0
      %v507 = vmax.f32 %v477, 0.0
      %v508 = vmax.f32 %v482, 0.0
      %v509 = vmax.f32 %v487, 0.0
      %v510 = vmax.f32 %v492, 0.0
      %v511 = vmax.f32 %v497, 0.0
      %v512 = vmax.f32 %v502, 0.0
      %v513 = vlaneseq
      %v514 = vshrl.u32 %v513, 7
      %v515 = vsub.s32 0, %v514
      %v516 = vrot.slane %v368, %v515
      %vm517 = vcmask 261120
      %v519 = vsel %vm517, %v505, 0
      %v522 = vsel %vm517, %v506, 0
      %v525 = vsel %vm517, %v507, 0
      %v528 = vsel %vm517, %v508, 0
      %v531 = vsel %vm517, %v509, 0
      %v534 = vsel %vm517, %v510, 0
      %v537 = vsel %vm517, %v511, 0
      %v540 = vsel %vm517, %v512, 0
      %542 = vmatprep.subr.mxu0 0.0
      %543 = vmatpush1.msra.mxu0 %v357
      %544 = vmatprep.subr.mxu0 0.0
      %545 = vmatpush1.msra.mxu0 %v358
      %546 = vmatprep.subr.mxu0 0.0
      %547 = vmatpush1.msra.mxu0 %v359
      %548 = vmatprep.subr.mxu0 0.0
      %549 = vmatpush1.msra.mxu0 %v360
      %550 = vmatprep.subr.mxu0 0.0
      %551 = vmatpush1.msra.mxu0 0.0
      %552 = vmatprep.subr.mxu0 0.0
      %553 = vmatpush1.msra.mxu0 0.0
      %554 = vmatprep.subr.mxu0 0.0
      %555 = vmatpush1.msra.mxu0 0.0
      %556 = vmatprep.subr.mxu0 0.0
      %557 = vmatpush1.msra.mxu0 0.0
      %558 = vmatprep.subr.mxu0 0.0
      %559 = vmatpush1.msra.mxu0 0.0
      %560 = vmatprep.subr.mxu0 0.0
      %561 = vmatpush1.msra.mxu0 0.0
      %562 = vmatprep.subr.mxu0 0.0
      %563 = vmatpush1.msra.mxu0 0.0
      %564 = vmatprep.subr.mxu0 0.0
      %565 = vmatpush1.msra.mxu0 0.0
      %566 = vmatprep.subr.mxu0 0.0
      %567 = vmatpush1.msra.mxu0 0.0
      %568 = vmatprep.subr.mxu0 0.0
      %569 = vmatpush1.msra.mxu0 0.0
      %570 = vmatprep.subr.mxu0 0.0
      %571 = vmatpush1.msra.mxu0 0.0
      %572 = vmatprep.subr.mxu0 0.0
      %573 = vmatpush1.msra.mxu0 0.0
      %574 = vmatprep.subr.mxu0 0.0
      %575 = vmatpush1.msra.mxu0 0.0
      %576 = vmatprep.subr.mxu0 0.0
      %577 = vmatpush1.msra.mxu0 0.0
      %578 = vmatprep.subr.mxu0 0.0
      %579 = vmatpush1.msra.mxu0 0.0
      %580 = vmatprep.subr.mxu0 0.0
      %581 = vmatpush1.msra.mxu0 0.0
      %582 = vmatprep.subr.mxu0 0.0
      %583 = vmatpush1.msra.mxu0 0.0
      %584 = vmatprep.subr.mxu0 0.0
      %585 = vmatpush1.msra.mxu0 0.0
      %586 = vmatprep.subr.mxu0 0.0
      %587 = vmatpush1.msra.mxu0 0.0
      %588 = vmatprep.subr.mxu0 0.0
      %589 = vmatpush1.msra.mxu0 0.0
      %590 = vmatprep.subr.mxu0 0.0
      %591 = vmatpush1.msra.mxu0 0.0
      %592 = vmatprep.subr.mxu0 0.0
      %593 = vmatpush1.msra.mxu0 0.0
      %594 = vmatprep.subr.mxu0 0.0
      %595 = vmatpush1.msra.mxu0 0.0
      %596 = vmatprep.subr.mxu0 0.0
      %597 = vmatpush1.msra.mxu0 0.0
      %598 = vmatprep.subr.mxu0 0.0
      %599 = vmatpush1.msra.mxu0 0.0
      %600 = vmatprep.subr.mxu0 0.0
      %601 = vmatpush1.msra.mxu0 0.0
      %602 = vmatprep.subr.mxu0 0.0
      %603 = vmatpush1.msra.mxu0 0.0
      %604 = vmatprep.subr.mxu0 0.0
      %605 = vmatpush1.msra.mxu0 0.0
      %606 = vmatprep.mubr.f32.mxu0 0.0
      %607 = vmatmul.mubr.f32.gmra.mrb[0].mxu0 %v519
      %v608 = vpop.f32.mrb[0].mxu0
      %v609 = vadd.f32 %v516, %v608
      %v610 = vpop.f32.mrb[0].mxu0
      %611 = vmatprep.mubr.f32.mxu0 0.0
      %612 = vmatmul.mubr.f32.gmra.mrb[0].mxu0 %v522
      %v613 = vpop.f32.mrb[0].mxu0
      %v614 = vadd.f32 %v516, %v613
      %v615 = vpop.f32.mrb[0].mxu0
      %616 = vmatprep.mubr.f32.mxu0 0.0
      %617 = vmatmul.mubr.f32.gmra.mrb[0].mxu0 %v525
      %v618 = vpop.f32.mrb[0].mxu0
      %v619 = vadd.f32 %v516, %v618
      %v620 = vpop.f32.mrb[0].mxu0
      %621 = vmatprep.mubr.f32.mxu0 0.0
      %622 = vmatmul.mubr.f32.gmra.mrb[0].mxu0 %v528
      %v623 = vpop.f32.mrb[0].mxu0
      %v624 = vadd.f32 %v516, %v623
      %v625 = vpop.f32.mrb[0].mxu0
      %626 = vmatprep.mubr.f32.mxu0 0.0
      %627 = vmatmul.mubr.f32.gmra.mrb[0].mxu0 %v531
      %v628 = vpop.f32.mrb[0].mxu0
      %v629 = vadd.f32 %v516, %v628
      %v630 = vpop.f32.mrb[0].mxu0
      %631 = vmatprep.mubr.f32.mxu0 0.0
      %632 = vmatmul.mubr.f32.gmra.mrb[0].mxu0 %v534
      %v633 = vpop.f32.mrb[0].mxu0
      %v634 = vadd.f32 %v516, %v633
      %v635 = vpop.f32.mrb[0].mxu0
      %636 = vmatprep.mubr.f32.mxu0 0.0
      %637 = vmatmul.mubr.f32.gmra.mrb[0].mxu0 %v537
      %v638 = vpop.f32.mrb[0].mxu0
      %v639 = vadd.f32 %v516, %v638
      %v640 = vpop.f32.mrb[0].mxu0
      %641 = vmatprep.mubr.f32.mxu0 0.0
      %642 = vmatmul.mubr.f32.gmra.mrb[0].mxu0 %v540
      %v643 = vpop.f32.mrb[0].mxu0
      %v644 = vadd.f32 %v516, %v643
      %v645 = vpop.f32.mrb[0].mxu0
      %646 = vdwg.mxu0
      %v647 = vmul.f32 %v609, 0.5
      %v648 = vmul.f32 %v614, 0.5
      %v649 = vmul.f32 %v619, 0.5
      %v650 = vmul.f32 %v624, 0.5
      %v651 = vmul.f32 %v629, 0.5
      %v652 = vmul.f32 %v634, 0.5
      %v653 = vmul.f32 %v639, 0.5
      %v654 = vmul.f32 %v644, 0.5
      %v655 = vmul.f32 %v647, 1.442695
      %v656 = vpow.pop %v655
      %v657 = vmul.f32 %v648, 1.442695
      %v658 = vpow.pop %v657
      %v659 = vmul.f32 %v649, 1.442695
      %v660 = vpow.pop %v659
      %v661 = vmul.f32 %v650, 1.442695
      %v662 = vpow.pop %v661
      %v663 = vmul.f32 %v651, 1.442695
      %v664 = vpow.pop %v663
      %v665 = vmul.f32 %v652, 1.442695
      %v666 = vpow.pop %v665
      %v667 = vmul.f32 %v653, 1.442695
      %v668 = vpow.pop %v667
      %v669 = vmul.f32 %v654, 1.442695
      %v670 = vpow.pop %v669
      %679 = vrot.lane.b32.xlu0 %v656, 112
      %v680 = vpop.permute.xlu0 %679
      %681 = vrot.lane.b32.xlu0 %v658, 112
      %v682 = vpop.permute.xlu0 %681
      %683 = vrot.lane.b32.xlu0 %v660, 112
      %v684 = vpop.permute.xlu0 %683
      %685 = vrot.lane.b32.xlu0 %v662, 112
      %v686 = vpop.permute.xlu0 %685
      %687 = vrot.lane.b32.xlu0 %v664, 112
      %v688 = vpop.permute.xlu0 %687
      %689 = vrot.lane.b32.xlu0 %v666, 112
      %v690 = vpop.permute.xlu0 %689
      %691 = vrot.lane.b32.xlu0 %v668, 112
      %v692 = vpop.permute.xlu0 %691
      %693 = vrot.lane.b32.xlu0 %v670, 112
      %v694 = vpop.permute.xlu0 %693
      %v703 = vmul.f32 %v341, %v680
      %v704 = vmul.f32 %v342, %v682
      %v705 = vmul.f32 %v343, %v684
      %v706 = vmul.f32 %v344, %v686
      %v707 = vmul.f32 %v345, %v688
      %v708 = vmul.f32 %v346, %v690
      %v709 = vmul.f32 %v347, %v692
      %v710 = vmul.f32 %v348, %v694
      %v711 = vadd.f32 %v609, %v703
      %v712 = vadd.f32 %v614, %v704
      %v713 = vadd.f32 %v619, %v705
      %v714 = vadd.f32 %v624, %v706
      %v715 = vadd.f32 %v629, %v707
      %v716 = vadd.f32 %v634, %v708
      %v717 = vadd.f32 %v639, %v709
      %v718 = vadd.f32 %v644, %v710
      %v719 = vlaneseq
      %v720 = vshrl.u32 %v719, 7
      %v721 = vsub.s32 0, %v720
      %v722 = vrot.slane %v369, %v721
      %vm723 = vcmask 130048
      %v725 = vsel %vm723, %v711, 0
      %v728 = vsel %vm723, %v712, 0
      %v731 = vsel %vm723, %v713, 0
      %v734 = vsel %vm723, %v714, 0
      %v737 = vsel %vm723, %v715, 0
      %v740 = vsel %vm723, %v716, 0
      %v743 = vsel %vm723, %v717, 0
      %v746 = vsel %vm723, %v718, 0
      %748 = vmatprep.subr.mxu0 0.0
      %749 = vmatpush1.msra.mxu0 %v361
      %750 = vmatprep.subr.mxu0 0.0
      %751 = vmatpush1.msra.mxu0 %v362
      %752 = vmatprep.subr.mxu0 0.0
      %753 = vmatpush1.msra.mxu0 0.0
      %754 = vmatprep.subr.mxu0 0.0
      %755 = vmatpush1.msra.mxu0 0.0
      %756 = vmatprep.subr.mxu0 0.0
      %757 = vmatpush1.msra.mxu0 0.0
      %758 = vmatprep.subr.mxu0 0.0
      %759 = vmatpush1.msra.mxu0 0.0
      %760 = vmatprep.subr.mxu0 0.0
      %761 = vmatpush1.msra.mxu0 0.0
      %762 = vmatprep.subr.mxu0 0.0
      %763 = vmatpush1.msra.mxu0 0.0
      %764 = vmatprep.subr.mxu0 0.0
      %765 = vmatpush1.msra.mxu0 0.0
      %766 = vmatprep.subr.mxu0 0.0
      %767 = vmatpush1.msra.mxu0 0.0
      %768 = vmatprep.subr.mxu0 0.0
      %769 = vmatpush1.msra.mxu0 0.0
      %770 = vmatprep.subr.mxu0 0.0
      %771 = vmatpush1.msra.mxu0 0.0
      %772 = vmatprep.subr.mxu0 0.0
      %773 = vmatpush1.msra.mxu0 0.0
      %774 = vmatprep.subr.mxu0 0.0
      %775 = vmatpush1.msra.mxu0 0.0
      %776 = vmatprep.subr.mxu0 0.0
      %777 = vmatpush1.msra.mxu0 0.0
      %778 = vmatprep.subr.mxu0 0.0
      %779 = vmatpush1.msra.mxu0 0.0
      %780 = vmatprep.subr.mxu0 0.0
      %781 = vmatpush1.msra.mxu0 0.0
      %782 = vmatprep.subr.mxu0 0.0
      %783 = vmatpush1.msra.mxu0 0.0
      %784 = vmatprep.subr.mxu0 0.0
      %785 = vmatpush1.msra.mxu0 0.0
      %786 = vmatprep.subr.mxu0 0.0
      %787 = vmatpush1.msra.mxu0 0.0
      %788 = vmatprep.subr.mxu0 0.0
      %789 = vmatpush1.msra.mxu0 0.0
      %790 = vmatprep.subr.mxu0 0.0
      %791 = vmatpush1.msra.mxu0 0.0
      %792 = vmatprep.subr.mxu0 0.0
      %793 = vmatpush1.msra.mxu0 0.0
      %794 = vmatprep.subr.mxu0 0.0
      %795 = vmatpush1.msra.mxu0 0.0
      %796 = vmatprep.subr.mxu0 0.0
      %797 = vmatpush1.msra.mxu0 0.0
      %798 = vmatprep.subr.mxu0 0.0
      %799 = vmatpush1.msra.mxu0 0.0
      %800 = vmatprep.subr.mxu0 0.0
      %801 = vmatpush1.msra.mxu0 0.0
      %802 = vmatprep.subr.mxu0 0.0
      %803 = vmatpush1.msra.mxu0 0.0
      %804 = vmatprep.subr.mxu0 0.0
      %805 = vmatpush1.msra.mxu0 0.0
      %806 = vmatprep.subr.mxu0 0.0
      %807 = vmatpush1.msra.mxu0 0.0
      %808 = vmatprep.subr.mxu0 0.0
      %809 = vmatpush1.msra.mxu0 0.0
      %810 = vmatprep.subr.mxu0 0.0
      %811 = vmatpush1.msra.mxu0 0.0
      %812 = vmatprep.mubr.f32.mxu0 0.0
      %813 = vmatmul.mubr.f32.gmra.mrb[0].mxu0 %v725
      %v814 = vpop.f32.mrb[0].mxu0
      %v815 = vadd.f32 %v722, %v814
      %v816 = vpop.f32.mrb[0].mxu0
      %817 = vmatprep.mubr.f32.mxu0 0.0
      %818 = vmatmul.mubr.f32.gmra.mrb[0].mxu0 %v728
      %v819 = vpop.f32.mrb[0].mxu0
      %v820 = vadd.f32 %v722, %v819
      %v821 = vpop.f32.mrb[0].mxu0
      %822 = vmatprep.mubr.f32.mxu0 0.0
      %823 = vmatmul.mubr.f32.gmra.mrb[0].mxu0 %v731
      %v824 = vpop.f32.mrb[0].mxu0
      %v825 = vadd.f32 %v722, %v824
      %v826 = vpop.f32.mrb[0].mxu0
      %827 = vmatprep.mubr.f32.mxu0 0.0
      %828 = vmatmul.mubr.f32.gmra.mrb[0].mxu0 %v734
      %v829 = vpop.f32.mrb[0].mxu0
      %v830 = vadd.f32 %v722, %v829
      %v831 = vpop.f32.mrb[0].mxu0
      %832 = vmatprep.mubr.f32.mxu0 0.0
      %833 = vmatmul.mubr.f32.gmra.mrb[0].mxu0 %v737
      %v834 = vpop.f32.mrb[0].mxu0
      %v835 = vadd.f32 %v722, %v834
      %v836 = vpop.f32.mrb[0].mxu0
      %837 = vmatprep.mubr.f32.mxu0 0.0
      %838 = vmatmul.mubr.f32.gmra.mrb[0].mxu0 %v740
      %v839 = vpop.f32.mrb[0].mxu0
      %v840 = vadd.f32 %v722, %v839
      %v841 = vpop.f32.mrb[0].mxu0
      %842 = vmatprep.mubr.f32.mxu0 0.0
      %843 = vmatmul.mubr.f32.gmra.mrb[0].mxu0 %v743
      %v844 = vpop.f32.mrb[0].mxu0
      %v845 = vadd.f32 %v722, %v844
      %v846 = vpop.f32.mrb[0].mxu0
      %847 = vmatprep.mubr.f32.mxu0 0.0
      %848 = vmatmul.mubr.f32.gmra.mrb[0].mxu0 %v746
      %v849 = vpop.f32.mrb[0].mxu0
      %v850 = vadd.f32 %v722, %v849
      %v851 = vpop.f32.mrb[0].mxu0
      %852 = vdwg.mxu0
      %v853 = vmax.f32 %v815, 0.0
      %v854 = vmax.f32 %v820, 0.0
      %v855 = vmax.f32 %v825, 0.0
      %v856 = vmax.f32 %v830, 0.0
      %v857 = vmax.f32 %v835, 0.0
      %v858 = vmax.f32 %v840, 0.0
      %v859 = vmax.f32 %v845, 0.0
      %v860 = vmax.f32 %v850, 0.0
      %v861 = vlaneseq
      %v862 = vshrl.u32 %v861, 7
      %v863 = vsub.s32 0, %v862
      %v864 = vrot.slane %v370, %v863
      %v866 = vsel %vm517, %v853, 0
      %v869 = vsel %vm517, %v854, 0
      %v872 = vsel %vm517, %v855, 0
      %v875 = vsel %vm517, %v856, 0
      %v878 = vsel %vm517, %v857, 0
      %v881 = vsel %vm517, %v858, 0
      %v884 = vsel %vm517, %v859, 0
      %v887 = vsel %vm517, %v860, 0
      %889 = vmatprep.subr.mxu0 0.0
      %890 = vmatpush1.msra.mxu0 %v363
      %891 = vmatprep.subr.mxu0 0.0
      %892 = vmatpush1.msra.mxu0 %v364
      %893 = vmatprep.subr.mxu0 0.0
      %894 = vmatpush1.msra.mxu0 %v365
      %895 = vmatprep.subr.mxu0 0.0
      %896 = vmatpush1.msra.mxu0 %v366
      %897 = vmatprep.subr.mxu0 0.0
      %898 = vmatpush1.msra.mxu0 0.0
      %899 = vmatprep.subr.mxu0 0.0
      %900 = vmatpush1.msra.mxu0 0.0
      %901 = vmatprep.subr.mxu0 0.0
      %902 = vmatpush1.msra.mxu0 0.0
      %903 = vmatprep.subr.mxu0 0.0
      %904 = vmatpush1.msra.mxu0 0.0
      %905 = vmatprep.subr.mxu0 0.0
      %906 = vmatpush1.msra.mxu0 0.0
      %907 = vmatprep.subr.mxu0 0.0
      %908 = vmatpush1.msra.mxu0 0.0
      %909 = vmatprep.subr.mxu0 0.0
      %910 = vmatpush1.msra.mxu0 0.0
      %911 = vmatprep.subr.mxu0 0.0
      %912 = vmatpush1.msra.mxu0 0.0
      %913 = vmatprep.subr.mxu0 0.0
      %914 = vmatpush1.msra.mxu0 0.0
      %915 = vmatprep.subr.mxu0 0.0
      %916 = vmatpush1.msra.mxu0 0.0
      %917 = vmatprep.subr.mxu0 0.0
      %918 = vmatpush1.msra.mxu0 0.0
      %919 = vmatprep.subr.mxu0 0.0
      %920 = vmatpush1.msra.mxu0 0.0
      %921 = vmatprep.subr.mxu0 0.0
      %922 = vmatpush1.msra.mxu0 0.0
      %923 = vmatprep.subr.mxu0 0.0
      %924 = vmatpush1.msra.mxu0 0.0
      %925 = vmatprep.subr.mxu0 0.0
      %926 = vmatpush1.msra.mxu0 0.0
      %927 = vmatprep.subr.mxu0 0.0
      %928 = vmatpush1.msra.mxu0 0.0
      %929 = vmatprep.subr.mxu0 0.0
      %930 = vmatpush1.msra.mxu0 0.0
      %931 = vmatprep.subr.mxu0 0.0
      %932 = vmatpush1.msra.mxu0 0.0
      %933 = vmatprep.subr.mxu0 0.0
      %934 = vmatpush1.msra.mxu0 0.0
      %935 = vmatprep.subr.mxu0 0.0
      %936 = vmatpush1.msra.mxu0 0.0
      %937 = vmatprep.subr.mxu0 0.0
      %938 = vmatpush1.msra.mxu0 0.0
      %939 = vmatprep.subr.mxu0 0.0
      %940 = vmatpush1.msra.mxu0 0.0
      %941 = vmatprep.subr.mxu0 0.0
      %942 = vmatpush1.msra.mxu0 0.0
      %943 = vmatprep.subr.mxu0 0.0
      %944 = vmatpush1.msra.mxu0 0.0
      %945 = vmatprep.subr.mxu0 0.0
      %946 = vmatpush1.msra.mxu0 0.0
      %947 = vmatprep.subr.mxu0 0.0
      %948 = vmatpush1.msra.mxu0 0.0
      %949 = vmatprep.subr.mxu0 0.0
      %950 = vmatpush1.msra.mxu0 0.0
      %951 = vmatprep.subr.mxu0 0.0
      %952 = vmatpush1.msra.mxu0 0.0
      %953 = vmatprep.mubr.f32.mxu0 0.0
      %954 = vmatmul.mubr.f32.gmra.mrb[0].mxu0 %v866
      %v955 = vpop.f32.mrb[0].mxu0
      %v956 = vadd.f32 %v864, %v955
      %v957 = vpop.f32.mrb[0].mxu0
      %958 = vmatprep.mubr.f32.mxu0 0.0
      %959 = vmatmul.mubr.f32.gmra.mrb[0].mxu0 %v869
      %v960 = vpop.f32.mrb[0].mxu0
      %v961 = vadd.f32 %v864, %v960
      %v962 = vpop.f32.mrb[0].mxu0
      %963 = vmatprep.mubr.f32.mxu0 0.0
      %964 = vmatmul.mubr.f32.gmra.mrb[0].mxu0 %v872
      %v965 = vpop.f32.mrb[0].mxu0
      %v966 = vadd.f32 %v864, %v965
      %v967 = vpop.f32.mrb[0].mxu0
      %968 = vmatprep.mubr.f32.mxu0 0.0
      %969 = vmatmul.mubr.f32.gmra.mrb[0].mxu0 %v875
      %v970 = vpop.f32.mrb[0].mxu0
      %v971 = vadd.f32 %v864, %v970
      %v972 = vpop.f32.mrb[0].mxu0
      %973 = vmatprep.mubr.f32.mxu0 0.0
      %974 = vmatmul.mubr.f32.gmra.mrb[0].mxu0 %v878
      %v975 = vpop.f32.mrb[0].mxu0
      %v976 = vadd.f32 %v864, %v975
      %v977 = vpop.f32.mrb[0].mxu0
      %978 = vmatprep.mubr.f32.mxu0 0.0
      %979 = vmatmul.mubr.f32.gmra.mrb[0].mxu0 %v881
      %v980 = vpop.f32.mrb[0].mxu0
      %v981 = vadd.f32 %v864, %v980
      %v982 = vpop.f32.mrb[0].mxu0
      %983 = vmatprep.mubr.f32.mxu0 0.0
      %984 = vmatmul.mubr.f32.gmra.mrb[0].mxu0 %v884
      %v985 = vpop.f32.mrb[0].mxu0
      %v986 = vadd.f32 %v864, %v985
      %v987 = vpop.f32.mrb[0].mxu0
      %988 = vmatprep.mubr.f32.mxu0 0.0
      %989 = vmatmul.mubr.f32.gmra.mrb[0].mxu0 %v887
      %v990 = vpop.f32.mrb[0].mxu0
      %v991 = vadd.f32 %v864, %v990
      %v992 = vpop.f32.mrb[0].mxu0
      %993 = vdwg.mxu0
      %v994 = vmul.f32 %v956, 0.5
      %v995 = vmul.f32 %v961, 0.5
      %v996 = vmul.f32 %v966, 0.5
      %v997 = vmul.f32 %v971, 0.5
      %v998 = vmul.f32 %v976, 0.5
      %v999 = vmul.f32 %v981, 0.5
      %v1000 = vmul.f32 %v986, 0.5
      %v1001 = vmul.f32 %v991, 0.5
      %v1002 = vtanh.pop %v994
      %v1003 = vtanh.pop %v995
      %v1004 = vtanh.pop %v996
      %v1005 = vtanh.pop %v997
      %v1006 = vtanh.pop %v998
      %v1007 = vtanh.pop %v999
      %v1008 = vtanh.pop %v1000
      %v1009 = vtanh.pop %v1001
      %v1010 = vmul.f32 %v1002, 0.5
      %v1011 = vmul.f32 %v1003, 0.5
      %v1012 = vmul.f32 %v1004, 0.5
      %v1013 = vmul.f32 %v1005, 0.5
      %v1014 = vmul.f32 %v1006, 0.5
      %v1015 = vmul.f32 %v1007, 0.5
      %v1016 = vmul.f32 %v1008, 0.5
      %v1017 = vmul.f32 %v1009, 0.5
      %v1018 = vadd.f32 %v1010, 0.5
      %v1019 = vadd.f32 %v1011, 0.5
      %v1020 = vadd.f32 %v1012, 0.5
      %v1021 = vadd.f32 %v1013, 0.5
      %v1022 = vadd.f32 %v1014, 0.5
      %v1023 = vadd.f32 %v1015, 0.5
      %v1024 = vadd.f32 %v1016, 0.5
      %v1025 = vadd.f32 %v1017, 0.5
      %v1026 = vpack.c.bf16 %v1019, %v1018
      %v1027 = vpack.c.bf16 %v1021, %v1020
      %v1028 = vpack.c.bf16 %v1023, %v1022
      %v1029 = vpack.c.bf16 %v1025, %v1024
      %v1034 = vunpack.c.l.b16 %v1026
      %v1035 = vunpack.c.h.b16 %v1026
      %v1036 = vunpack.c.l.b16 %v1027
      %v1037 = vunpack.c.h.b16 %v1027
      %v1038 = vunpack.c.l.b16 %v1028
      %v1039 = vunpack.c.h.b16 %v1028
      %v1040 = vunpack.c.l.b16 %v1029
      %v1041 = vunpack.c.h.b16 %v1029
      %v1042 = vpack.c.b16 %v1034, %v1034
      %v1043 = vpack.c.b16 %v1035, %v1035
      %v1044 = vpack.c.b16 %v1036, %v1036
      %v1045 = vpack.c.b16 %v1037, %v1037
      %v1046 = vpack.c.b16 %v1038, %v1038
      %v1047 = vpack.c.b16 %v1039, %v1039
      %v1048 = vpack.c.b16 %v1040, %v1040
      %v1049 = vpack.c.b16 %v1041, %v1041
      %vm1058 = vcmask 519168
      %1059 = vst.msk [vmem:[%s297] sm:$0xf] %vm1058, %v1042
      %1060 = vst.msk [vmem:[%s297 + $0x4] sm:$0xf] %vm1058, %v1043
      %1061 = vst.msk [vmem:[%s297 + $0x8] sm:$0xf] %vm1058, %v1044
      %1062 = vst.msk [vmem:[%s297 + $0xc] sm:$0xf] %vm1058, %v1045
      %1063 = vst.msk [vmem:[%s297 + $0x10] sm:$0xf] %vm1058, %v1046
      %1064 = vst.msk [vmem:[%s297 + $0x14] sm:$0xf] %vm1058, %v1047
      %1065 = vst.msk [vmem:[%s297 + $0x18] sm:$0xf] %vm1058, %v1048
      %1066 = vst.msk [vmem:[%s297 + $0x1c] sm:$0xf] %vm1058, %v1049
      %1067 = vst.msk [vmem:[%s303] sm:$0xff] %vm723, %v609
      %1068 = vst.msk [vmem:[%s303 + $0x8] sm:$0xff] %vm723, %v614
      %1069 = vst.msk [vmem:[%s303 + $0x10] sm:$0xff] %vm723, %v619
      %1070 = vst.msk [vmem:[%s303 + $0x18] sm:$0xff] %vm723, %v624
      %1071 = vst.msk [vmem:[%s303 + $0x20] sm:$0xff] %vm723, %v629
      %1072 = vst.msk [vmem:[%s303 + $0x28] sm:$0xff] %vm723, %v634
      %1073 = vst.msk [vmem:[%s303 + $0x30] sm:$0xff] %vm723, %v639
      %1074 = vst.msk [vmem:[%s303 + $0x38] sm:$0xff] %vm723, %v644
      %1083 = vrot.lane.b32.xlu0 %v609, 112
      %v1084 = vpop.permute.xlu0 %1083
      %1085 = vrot.lane.b32.xlu0 %v614, 112
      %v1086 = vpop.permute.xlu0 %1085
      %1087 = vrot.lane.b32.xlu0 %v619, 112
      %v1088 = vpop.permute.xlu0 %1087
      %1089 = vrot.lane.b32.xlu0 %v624, 112
      %v1090 = vpop.permute.xlu0 %1089
      %1091 = vrot.lane.b32.xlu0 %v629, 112
      %v1092 = vpop.permute.xlu0 %1091
      %1093 = vrot.lane.b32.xlu0 %v634, 112
      %v1094 = vpop.permute.xlu0 %1093
      %1095 = vrot.lane.b32.xlu0 %v639, 112
      %v1096 = vpop.permute.xlu0 %1095
      %1097 = vrot.lane.b32.xlu0 %v644, 112
      %v1098 = vpop.permute.xlu0 %1097
      %1107 = vst.msk [vmem:[%s309] sm:$0xff] %vm723, %v1084
      %1108 = vst.msk [vmem:[%s309 + $0x8] sm:$0xff] %vm723, %v1086
      %1109 = vst.msk [vmem:[%s309 + $0x10] sm:$0xff] %vm723, %v1088
      %1110 = vst.msk [vmem:[%s309 + $0x18] sm:$0xff] %vm723, %v1090
      %1111 = vst.msk [vmem:[%s309 + $0x20] sm:$0xff] %vm723, %v1092
      %1112 = vst.msk [vmem:[%s309 + $0x28] sm:$0xff] %vm723, %v1094
      %1113 = vst.msk [vmem:[%s309 + $0x30] sm:$0xff] %vm723, %v1096
      %1114 = vst.msk [vmem:[%s309 + $0x38] sm:$0xff] %vm723, %v1098
      %1115 = vst.msk [vmem:[%s315] sm:$0xff] %vm723, %v711
      %1116 = vst.msk [vmem:[%s315 + $0x8] sm:$0xff] %vm723, %v712
      %1117 = vst.msk [vmem:[%s315 + $0x10] sm:$0xff] %vm723, %v713
      %1118 = vst.msk [vmem:[%s315 + $0x18] sm:$0xff] %vm723, %v714
      %1119 = vst.msk [vmem:[%s315 + $0x20] sm:$0xff] %vm723, %v715
      %1120 = vst.msk [vmem:[%s315 + $0x28] sm:$0xff] %vm723, %v716
      %1121 = vst.msk [vmem:[%s315 + $0x30] sm:$0xff] %vm723, %v717
      %1122 = vst.msk [vmem:[%s315 + $0x38] sm:$0xff] %vm723, %v718
      %s1123 = smul.u32 8, %s18
      %p1124 = scmp.lt.s32.totalorder %s1123, 15
      %s1125 = scalar_select %p1124, %s1123, 15
      %s1126 = smul.addr %s1125, 4
      %s1127 = scalar_lea.vmem %s3, %s1126
      %s1128 = smul.u32 8, %s18
      %p1129 = scmp.lt.s32.totalorder %s1128, 15
      %s1130 = scalar_select %p1129, %s1128, 15
      %s1131 = smul.addr %s1130, 8
      %s1132 = scalar_lea.vmem %s4, %s1131
      %s1133 = smul.u32 8, %s18
      %p1134 = scmp.lt.s32.totalorder %s1133, 15
      %s1135 = scalar_select %p1134, %s1133, 15
      %s1136 = smul.addr %s1135, 8
      %s1137 = scalar_lea.vmem %s5, %s1136
      %s1138 = smul.u32 8, %s18
      %p1139 = scmp.lt.s32.totalorder %s1138, 15
      %s1140 = scalar_select %p1139, %s1138, 15
      %s1141 = smul.addr %s1140, 8
      %s1142 = scalar_lea.vmem %s6, %s1141
      // Predicated region
      $region33: #{tpu_custom_call.1} parent=31 // pred_check
        %p1143 = pneg %p109
      $region34: #{tpu_custom_call.1} parent=31 // pred_check_branch
        %1145 = sbr.rel (%p1143) target = $region36
      $region35: #{tpu_custom_call.1} parent=31 // pred_region
        %s1146 = smul.u32 8, %s18
      $region36: #{tpu_custom_call.1} parent=31 // pred_fallthru
        _
      // Predicated region
      $region37: #{tpu_custom_call.1} parent=31 // pred_check
        %p1147 = pneg %p135
      $region38: #{tpu_custom_call.1} parent=31 // pred_check_branch
        %1149 = sbr.rel (%p1147) target = $region40
      $region39: #{tpu_custom_call.1} parent=31 // pred_region
        %s1150 = smul.u32 8, %s18
      $region40: #{tpu_custom_call.1} parent=31 // pred_fallthru
        _
      // Predicated region
      $region41: #{tpu_custom_call.1} parent=31 // pred_check
        %p1151 = pneg %p161
      $region42: #{tpu_custom_call.1} parent=31 // pred_check_branch
        %1153 = sbr.rel (%p1151) target = $region44
      $region43: #{tpu_custom_call.1} parent=31 // pred_region
        %s1154 = smul.u32 8, %s18
      $region44: #{tpu_custom_call.1} parent=31 // pred_fallthru
        _
      // Predicated region
      $region45: #{tpu_custom_call.1} parent=31 // pred_check
        %p1155 = pneg %p187
      $region46: #{tpu_custom_call.1} parent=31 // pred_check_branch
        %1157 = sbr.rel (%p1155) target = $region48
      $region47: #{tpu_custom_call.1} parent=31 // pred_region
        %s1158 = smul.u32 8, %s18
      $region48: #{tpu_custom_call.1} parent=31 // pred_fallthru
        _
    $region32: #{tpu_custom_call.1} parent=5 // pred_fallthru
      _
    %p1159 = scmp.le.s32.totalorder 2, %s13
    // Predicated region
    $region49: #{tpu_custom_call.1} parent=5 // pred_check
      %p1160 = pneg %p1159
    $region50: #{tpu_custom_call.1} parent=5 // pred_check_branch
      %1162 = sbr.rel (%p1160) target = $region52
    $region51: #{tpu_custom_call.1} parent=5 // pred_region
      %s1163 = ssub.s32 %s13, 2
      // Predicated region
      $region53: #{tpu_custom_call.1} parent=51 // pred_check
        %p1164 = pneg %p115
      $region54: #{tpu_custom_call.1} parent=51 // pred_check_branch
        %1166 = sbr.rel (%p1164) target = $region56
      $region55: #{tpu_custom_call.1} parent=51 // pred_region
        %s1167 = smul.u32 8, %s19
        %p1168 = scmp.lt.s32.totalorder %s1167, 15
        %s1169 = scalar_select %p1168, %s1167, 15
        %s1170 = smul.addr %s1169, 4
        %s1171 = scalar_lea.vmem %s3, %s1170
      $region56: #{tpu_custom_call.1} parent=51 // pred_fallthru
        _
      // Predicated region
      $region57: #{tpu_custom_call.1} parent=51 // pred_check
        %p1172 = pneg %p141
      $region58: #{tpu_custom_call.1} parent=51 // pred_check_branch
        %1174 = sbr.rel (%p1172) target = $region60
      $region59: #{tpu_custom_call.1} parent=51 // pred_region
        %s1175 = smul.u32 8, %s19
        %p1176 = scmp.lt.s32.totalorder %s1175, 15
        %s1177 = scalar_select %p1176, %s1175, 15
        %s1178 = smul.addr %s1177, 8
        %s1179 = scalar_lea.vmem %s4, %s1178
      $region60: #{tpu_custom_call.1} parent=51 // pred_fallthru
        _
      // Predicated region
      $region61: #{tpu_custom_call.1} parent=51 // pred_check
        %p1180 = pneg %p167
      $region62: #{tpu_custom_call.1} parent=51 // pred_check_branch
        %1182 = sbr.rel (%p1180) target = $region64
      $region63: #{tpu_custom_call.1} parent=51 // pred_region
        %s1183 = smul.u32 8, %s19
        %p1184 = scmp.lt.s32.totalorder %s1183, 15
        %s1185 = scalar_select %p1184, %s1183, 15
        %s1186 = smul.addr %s1185, 8
        %s1187 = scalar_lea.vmem %s5, %s1186
      $region64: #{tpu_custom_call.1} parent=51 // pred_fallthru
        _
      // Predicated region
      $region65: #{tpu_custom_call.1} parent=51 // pred_check
        %p1188 = pneg %p193
      $region66: #{tpu_custom_call.1} parent=51 // pred_check_branch
        %1190 = sbr.rel (%p1188) target = $region68
      $region67: #{tpu_custom_call.1} parent=51 // pred_region
        %s1191 = smul.u32 8, %s19
        %p1192 = scmp.lt.s32.totalorder %s1191, 15
        %s1193 = scalar_select %p1192, %s1191, 15
        %s1194 = smul.addr %s1193, 8
        %s1195 = scalar_lea.vmem %s6, %s1194
      $region68: #{tpu_custom_call.1} parent=51 // pred_fallthru
        _
    $region52: #{tpu_custom_call.1} parent=5 // pred_fallthru
      _
  $region6: #{tpu_custom_call.1} parent=0 // loop_footer
    %s17 = sadd.s32 1, %s13
  $region7: #{tpu_custom_call.1} parent=0 // loop_footer_branch
    %12 = sbr.rel target = $region3
  $region8: #{tpu_custom_call.1} parent=0 // loop_exit
    _

</llo_original>
